<compile_context>
chip_gen: v7x
topology: tpu7x:2x2x1
jax: 0.10.0
libtpu: 0.0.40
codegen_flags: <defaults>
</compile_context>

<pallas_src>
import jax
import jax.numpy as jnp
from jax.experimental import pallas as pl
from jax.experimental.pallas import tpu as pltpu


def _round_up(v, m):
    return (v + m - 1) // m * m


def padded_size(n, tile=256):
    """Node count after padding to the aggregation tile size."""
    return _round_up(n, tile)


def prepare_adjacency(adj, n_p):
    """Cast a 0/1 adjacency to int8 and zero-pad to (n_p, n_p).

    Exact only for a binary adjacency (sum aggregation).  Callers that reuse
    the graph across layers/steps should call this once and cache the result
    so the cast+pad HBM pass is not redone per forward call.
    """
    n = adj.shape[0]
    a = adj.astype(jnp.int8)
    if n_p != n:
        a = jnp.pad(a, ((0, n_p - n), (0, n_p - n)))
    return a


# ---------------------------------------------------------------------------
# Kernel 1: node-wise Linear   h = x @ Wt + b      (bf16 MXU, f32 accumulate)
# ---------------------------------------------------------------------------
def linear_kernel(x_ref, wt_ref, b_ref, h_ref):
    acc = jnp.dot(x_ref[...], wt_ref[...], preferred_element_type=jnp.float32)
    h_ref[...] = (acc + b_ref[...]).astype(h_ref.dtype)   # -> bf16 h


# ---------------------------------------------------------------------------
# Kernel 2: sum aggregation    out = A @ h   (K-tiled, f32 scratch accumulator)
# ---------------------------------------------------------------------------
def aggregate_kernel(adj_ref, h_ref, o_ref, acc_ref):
    k = pl.program_id(1)

    @pl.when(k == 0)
    def _():
        acc_ref[...] = jnp.zeros_like(acc_ref)

    # int8 A strip -> bf16 on the VPU, then bf16 x bf16 MXU matmul, f32 acc.
    a_bf16 = adj_ref[...].astype(jnp.bfloat16)
    acc_ref[...] += jnp.dot(a_bf16, h_ref[...],
                            preferred_element_type=jnp.float32)

    @pl.when(k == pl.num_programs(1) - 1)
    def _():
        o_ref[...] = acc_ref[...].astype(o_ref.dtype)


def sum_aggregator(adj, x, w, b, *, tile=256,
                   vmem_limit_bytes=40 * 1024 * 1024):
    """out = adj @ (x @ w.T + b).

    adj: (N, N) dense 0/1 adjacency (any float/int dtype), or a pre-prepared
         int8 (N_p, N_p) array from prepare_adjacency() (cached path).
    x:   (N, Cin) node features, w: (Cout, Cin), b: (Cout,)
    -> (N, Cout) in x.dtype.

    tile: row/contraction tile for the aggregation matmul; keep a multiple of
    128 (256 default; 512+ is fine on v5e/v6e's 128 MiB VMEM for large N).
    """
    n, c_in = x.shape
    c_out = w.shape[0]
    assert b.shape == (c_out,)

    # Lane-dense padding of the channel dims; contraction dim padded to tile.
    c_in_p = _round_up(c_in, 128)
    c_out_p = _round_up(c_out, 128)
    n_p = padded_size(n, tile)

    # Adjacency: use the cached int8 padded form if given, else prepare here.
    if adj.shape == (n_p, n_p) and adj.dtype == jnp.int8:
        adj_p = adj                     # pre-prepared & cached by the caller
    else:
        assert adj.shape == (n, n)
        adj_p = prepare_adjacency(adj, n_p)   # exact for a 0/1 adjacency

    bf16 = jnp.bfloat16
    f32 = jnp.float32
    # Zero-padding is exact: padded adjacency rows/cols are 0, padded h rows
    # (which equal the bias) only meet zero adjacency columns, and padded
    # feature columns are 0 in both x and Wt.
    x_p = jnp.zeros((n_p, c_in_p), bf16).at[:n, :c_in].set(x.astype(bf16))
    wt_p = jnp.zeros((c_in_p, c_out_p), bf16).at[:c_in, :c_out].set(
        w.astype(bf16).T)               # pre-transposed: no in-kernel .T
    b_p = jnp.zeros((1, c_out_p), f32).at[0, :c_out].set(b.astype(f32))

    # --- stage 1: h = x @ Wt + b  (computed once, row-tiled, bf16 result) ---
    # TODO(synk): wt_p / b_p have constant index maps; pipeline_mode=
    # pl.Buffered(1) would drop their second VMEM buffer (minor with K-tiling).
    h = pl.pallas_call(
        linear_kernel,
        out_shape=jax.ShapeDtypeStruct((n_p, c_out_p), bf16),
        grid=(n_p // tile,),
        in_specs=[
            pl.BlockSpec((tile, c_in_p), lambda i: (i, 0)),
            pl.BlockSpec((c_in_p, c_out_p), lambda i: (0, 0)),
            pl.BlockSpec((1, c_out_p), lambda i: (0, 0)),
        ],
        out_specs=pl.BlockSpec((tile, c_out_p), lambda i: (i, 0)),
        compiler_params=pltpu.CompilerParams(
            dimension_semantics=("parallel",),
            vmem_limit_bytes=vmem_limit_bytes),
    )(x_p, wt_p, b_p)

    # --- stage 2: out = A @ h  (K-tiled, int8 A streamed, f32 accumulator) --
    out_p = pl.pallas_call(
        aggregate_kernel,
        out_shape=jax.ShapeDtypeStruct((n_p, c_out_p), x.dtype),
        grid_spec=pltpu.PrefetchScalarGridSpec(
            num_scalar_prefetch=0,
            grid=(n_p // tile, n_p // tile),
            in_specs=[
                pl.BlockSpec((tile, tile), lambda i, k: (i, k)),       # A tile
                pl.BlockSpec((tile, c_out_p), lambda i, k: (k, 0)),    # h tile
            ],
            out_specs=pl.BlockSpec((tile, c_out_p), lambda i, k: (i, 0)),
            scratch_shapes=[pltpu.VMEM((tile, c_out_p), jnp.float32)],
        ),
        compiler_params=pltpu.CompilerParams(
            dimension_semantics=("parallel", "arbitrary"),
            vmem_limit_bytes=vmem_limit_bytes),
    )(adj_p, h)

    return out_p[:n, :c_out]


if __name__ == "__main__":
    # Small shapes consistent with the module: N nodes, in_channels -> out_channels.
    N, C_IN, C_OUT = 16, 32, 32

    key = jax.random.PRNGKey(0)
    k_x, k_adj, k_w, k_b = jax.random.split(key, 4)

    # Node features.
    x = jax.random.normal(k_x, (N, C_IN), dtype=jnp.float32)

    # Deterministic synthetic 0/1 adjacency (sum aggregation).
    adj = (jax.random.uniform(k_adj, (N, N)) < 0.25).astype(jnp.float32)

    # nn.Linear(in_channels, out_channels, bias=True) params (PyTorch scale).
    bound = 1.0 / (C_IN ** 0.5)
    w = jax.random.uniform(k_w, (C_OUT, C_IN), minval=-bound, maxval=bound,
                           dtype=jnp.float32)
    b = jax.random.uniform(k_b, (C_OUT,), minval=-bound, maxval=bound,
                           dtype=jnp.float32)

    # Hoist the adjacency cast+pad (would be cached across layers/steps).
    adj_i8 = prepare_adjacency(adj, padded_size(N))

    out = sum_aggregator(adj_i8, x, w, b)
    out = jax.block_until_ready(out)

    # Reference check in plain JAX (f32); bf16 h/operands => looser tolerance.
    ref = adj @ (x @ w.T + b)
    assert out.shape == (N, C_OUT)
    assert jnp.allclose(out, ref, atol=5e-2, rtol=5e-2), (
        float(jnp.max(jnp.abs(out - ref))))

    print("KERNEL_OK")
</pallas_src>

<mosaic_0001>
module attributes {stable_mosaic.version = 11 : i64} {
  func.func @linear_kernel(%arg0: i32, %arg1: memref<256x128xbf16, #tpu.memory_space<vmem>>, %arg2: memref<128x128xbf16, #tpu.memory_space<vmem>>, %arg3: memref<1x128xf32, #tpu.memory_space<vmem>>, %arg4: memref<256x128xbf16, #tpu.memory_space<vmem>>) attributes {dimension_semantics = [#tpu.dimension_semantics<parallel>], iteration_bounds = array<i64: 1>, scalar_prefetch = 0 : i64, scratch_operands = 0 : i64, tpu.core_type = #tpu.core_type<tc>, window_params = [{transform_indices = @transform_0, window_bounds = array<i64: 256, 128>}, {pipeline_mode = #tpu.pipeline_mode<synchronous>, transform_indices = @transform_1, window_bounds = array<i64: 128, 128>}, {pipeline_mode = #tpu.pipeline_mode<synchronous>, transform_indices = @transform_2, window_bounds = array<i64: 1, 128>}, {transform_indices = @transform_3, window_bounds = array<i64: 256, 128>}]} {
    %c0 = arith.constant 0 : index
    %c0_0 = arith.constant 0 : index
    %0 = vector.load %arg1[%c0, %c0_0] : memref<256x128xbf16, #tpu.memory_space<vmem>>, vector<256x128xbf16>
    %c0_1 = arith.constant 0 : index
    %c0_2 = arith.constant 0 : index
    %1 = vector.load %arg2[%c0_1, %c0_2] : memref<128x128xbf16, #tpu.memory_space<vmem>>, vector<128x128xbf16>
    %cst = arith.constant dense<0.000000e+00> : vector<256x128xf32>
    %2 = tpu.matmul %0, %1, %cst {dimension_numbers = #tpu.dot_dimension_numbers<[1], [0], [0], [1], [0, 0, 1, 1], [], []>} : vector<256x128xbf16>, vector<128x128xbf16>, vector<256x128xf32> -> vector<256x128xf32>
    %c0_3 = arith.constant 0 : index
    %c0_4 = arith.constant 0 : index
    %3 = vector.load %arg3[%c0_3, %c0_4] : memref<1x128xf32, #tpu.memory_space<vmem>>, vector<1x128xf32>
    %4 = vector.broadcast %3 : vector<1x128xf32> to vector<256x128xf32>
    %5 = arith.addf %2, %4 : vector<256x128xf32>
    %6 = arith.truncf %5 : vector<256x128xf32> to vector<256x128xbf16>
    %c0_5 = arith.constant 0 : index
    %c0_6 = arith.constant 0 : index
    %7 = vector.load %arg4[%c0_5, %c0_6] : memref<256x128xbf16, #tpu.memory_space<vmem>>, vector<256x128xbf16>
    tpu.vector_store %arg4[%c0_5, %c0_6], %6 {strides = array<i32>} : memref<256x128xbf16, #tpu.memory_space<vmem>>, vector<256x128xbf16>,
    return
  }
  func.func @transform_0(%arg0: i32) -> (i32, i32) {
    %c0_i32 = arith.constant 0 : i32
    %c0_i32_0 = arith.constant 0 : i32
    return %arg0, %c0_i32 : i32, i32
  }
  func.func @transform_1(%arg0: i32) -> (i32, i32) {
    %c0_i32 = arith.constant 0 : i32
    %c0_i32_0 = arith.constant 0 : i32
    %c0_i32_1 = arith.constant 0 : i32
    return %c0_i32, %c0_i32_0 : i32, i32
  }
  func.func @transform_2(%arg0: i32) -> (i32, i32) {
    %c0_i32 = arith.constant 0 : i32
    %c0_i32_0 = arith.constant 0 : i32
    %c0_i32_1 = arith.constant 0 : i32
    return %c0_i32, %c0_i32_0 : i32, i32
  }
  func.func @transform_3(%arg0: i32) -> (i32, i32) {
    %c0_i32 = arith.constant 0 : i32
    %c0_i32_0 = arith.constant 0 : i32
    return %arg0, %c0_i32 : i32, i32
  }
}

</mosaic_0001>

<llo_original>
// kernel: tpu_custom_call.1
$region0: #{tpu_custom_call.1}
  #allocation0 [shape = 'u32[]', space=smem, size = 0x4, offset = 0x4, fixed_abs, tag = 'smem constant byte address 0x4 - core index']
  #allocation1 [shape = 'u32[144,128]{1,0:T(1,128)}', space=vmem, size = 0x12000, scoped, tag = 'internal scratch']
  %s0 = inlined_call_operand.hbm [shape: bf16[256,128], index: 0, kind: input, shape index: {}]
  %s1 = inlined_call_operand.hbm [shape: bf16[128,128], index: 1, kind: input, shape index: {}]
  %s2 = inlined_call_operand.vmem [shape: f32[1,128], index: 2, kind: input, shape index: {}]
  %s3 = inlined_call_operand.hbm [shape: bf16[256,128], index: 3, kind: output, shape index: {}]
  %s4 = sld [smem:[#allocation0]]
  $region30: #{tpu_custom_call.1} parent=0
    _
  %s6 = ssub.s32 1, %s4
  %s7 = scalar_select 0, %s6, %s4
  $region1: #{tpu_custom_call.1} parent=0
    #allocation2 [shape = 'u8[65536]{0}', space=vmem, size = 0x10000, scoped, tag = 'input window, operand 0, single buffered']
    #allocation3 [shape = 's32[1]{0}', space=sflag, size = 0x4, scoped, tag = 'scoped memory for tpu_custom_call.1']
    #allocation4 [shape = 's32[1]{0}', space=sflag, size = 0x4, scoped, tag = 'scoped memory for tpu_custom_call.1']
    #allocation5 [shape = 'u8[32768]{0}', space=vmem, size = 0x8000, scoped, tag = 'input window, operand 1, single buffered']
    #allocation6 [shape = 's32[1]{0}', space=sflag, size = 0x4, scoped, tag = 'scoped memory for tpu_custom_call.1']
    #allocation7 [shape = 'u8[65536]{0}', space=vmem, size = 0x10000, scoped, tag = 'output window, operand 0, single buffered']
    %8 = vsyncpa [#allocation3], 0
    %9 = vsyncpa [#allocation6], 0
    %10 = vsyncpa [#allocation4], 0
    // Predicated region
    $region2: #{tpu_custom_call.1} parent=1 // pred_check
      _
    $region3: #{tpu_custom_call.1} parent=1 // pred_check_branch
      %12 = sbr.rel (0) target = $region5
    $region4: #{tpu_custom_call.1} parent=1 // pred_region
      %s14 = ssub.s32 2048, 2048
      %15 = vsyncadd [#allocation3], %s14
      %s16 = sshll.u32 [#allocation2], 4
      %s17 = int_to_ptr.vmem [resolvable:$true] %s16
      %22 = dma.hbm_to_vmem [thread:$0]  %s0, 2048, %s17, [#allocation3], 64, 64, 4
    $region5: #{tpu_custom_call.1} parent=1 // pred_fallthru
      _
    // Predicated region
    $region6: #{tpu_custom_call.1} parent=1 // pred_check
      _
    $region7: #{tpu_custom_call.1} parent=1 // pred_check_branch
      %24 = sbr.rel (0) target = $region9
    $region8: #{tpu_custom_call.1} parent=1 // pred_region
      %s26 = ssub.s32 1024, 1024
      %27 = vsyncadd [#allocation6], %s26
      %s28 = sshll.u32 [#allocation5], 4
      %s29 = int_to_ptr.vmem [resolvable:$true] %s28
      %34 = dma.hbm_to_vmem [thread:$0]  %s1, 1024, %s29, [#allocation6], 64, 64, 4
    $region9: #{tpu_custom_call.1} parent=1 // pred_fallthru
      _
    // Predicated region
    $region10: #{tpu_custom_call.1} parent=1 // pred_check
      _
    $region11: #{tpu_custom_call.1} parent=1 // pred_check_branch
      %36 = sbr.rel (0) target = $region13
    $region12: #{tpu_custom_call.1} parent=1 // pred_region
      _
    $region13: #{tpu_custom_call.1} parent=1 // pred_fallthru
      _
    // Predicated region
    $region14: #{tpu_custom_call.1} parent=1 // pred_check
      _
    $region15: #{tpu_custom_call.1} parent=1 // pred_check_branch
      %38 = sbr.rel (0) target = $region17
    $region16: #{tpu_custom_call.1} parent=1 // pred_region
      %39 = dma.done [#allocation3], 2048
    $region17: #{tpu_custom_call.1} parent=1 // pred_fallthru
      _
    // Predicated region
    $region18: #{tpu_custom_call.1} parent=1 // pred_check
      _
    $region19: #{tpu_custom_call.1} parent=1 // pred_check_branch
      %41 = sbr.rel (0) target = $region21
    $region20: #{tpu_custom_call.1} parent=1 // pred_region
      %42 = dma.done [#allocation6], 1024
    $region21: #{tpu_custom_call.1} parent=1 // pred_fallthru
      _
    %v44 = vld [vmem:[#allocation2] sm:$0xf]
    %v45 = vld [vmem:[#allocation2 + $0x4] sm:$0xf]
    %v46 = vld [vmem:[#allocation2 + $0x8] sm:$0xf]
    %v47 = vld [vmem:[#allocation2 + $0xc] sm:$0xf]
    %v48 = vld [vmem:[#allocation2 + $0x10] sm:$0xf]
    %v49 = vld [vmem:[#allocation2 + $0x14] sm:$0xf]
    %v50 = vld [vmem:[#allocation2 + $0x18] sm:$0xf]
    %v51 = vld [vmem:[#allocation2 + $0x1c] sm:$0xf]
    %v52 = vld [vmem:[#allocation2 + $0x20] sm:$0xf]
    %v53 = vld [vmem:[#allocation2 + $0x24] sm:$0xf]
    %v54 = vld [vmem:[#allocation2 + $0x28] sm:$0xf]
    %v55 = vld [vmem:[#allocation2 + $0x2c] sm:$0xf]
    %v56 = vld [vmem:[#allocation2 + $0x30] sm:$0xf]
    %v57 = vld [vmem:[#allocation2 + $0x34] sm:$0xf]
    %v58 = vld [vmem:[#allocation2 + $0x38] sm:$0xf]
    %v59 = vld [vmem:[#allocation2 + $0x3c] sm:$0xf]
    %v60 = vld [vmem:[#allocation2 + $0x40] sm:$0xf]
    %v61 = vld [vmem:[#allocation2 + $0x44] sm:$0xf]
    %v62 = vld [vmem:[#allocation2 + $0x48] sm:$0xf]
    %v63 = vld [vmem:[#allocation2 + $0x4c] sm:$0xf]
    %v64 = vld [vmem:[#allocation2 + $0x50] sm:$0xf]
    %v65 = vld [vmem:[#allocation2 + $0x54] sm:$0xf]
    %v66 = vld [vmem:[#allocation2 + $0x58] sm:$0xf]
    %v67 = vld [vmem:[#allocation2 + $0x5c] sm:$0xf]
    %v68 = vld [vmem:[#allocation2 + $0x60] sm:$0xf]
    %v69 = vld [vmem:[#allocation2 + $0x64] sm:$0xf]
    %v70 = vld [vmem:[#allocation2 + $0x68] sm:$0xf]
    %v71 = vld [vmem:[#allocation2 + $0x6c] sm:$0xf]
    %v72 = vld [vmem:[#allocation2 + $0x70] sm:$0xf]
    %v73 = vld [vmem:[#allocation2 + $0x74] sm:$0xf]
    %v74 = vld [vmem:[#allocation2 + $0x78] sm:$0xf]
    %v75 = vld [vmem:[#allocation2 + $0x7c] sm:$0xf]
    %v76 = vld [vmem:[#allocation5] sm:$0xf]
    %v77 = vld [vmem:[#allocation5 + $0x4] sm:$0xf]
    %v78 = vld [vmem:[#allocation5 + $0x8] sm:$0xf]
    %v79 = vld [vmem:[#allocation5 + $0xc] sm:$0xf]
    %v80 = vld [vmem:[#allocation5 + $0x10] sm:$0xf]
    %v81 = vld [vmem:[#allocation5 + $0x14] sm:$0xf]
    %v82 = vld [vmem:[#allocation5 + $0x18] sm:$0xf]
    %v83 = vld [vmem:[#allocation5 + $0x1c] sm:$0xf]
    %v84 = vld [vmem:[#allocation5 + $0x20] sm:$0xf]
    %v85 = vld [vmem:[#allocation5 + $0x24] sm:$0xf]
    %v86 = vld [vmem:[#allocation5 + $0x28] sm:$0xf]
    %v87 = vld [vmem:[#allocation5 + $0x2c] sm:$0xf]
    %v88 = vld [vmem:[#allocation5 + $0x30] sm:$0xf]
    %v89 = vld [vmem:[#allocation5 + $0x34] sm:$0xf]
    %v90 = vld [vmem:[#allocation5 + $0x38] sm:$0xf]
    %v91 = vld [vmem:[#allocation5 + $0x3c] sm:$0xf]
    %v92 = vld [vmem:[%s2] sm:$0x1]
    %v94 = vlaneseq
    %v95 = vshrl.u32 %v94, 7
    %v96 = vsub.s32 0, %v95
    %v97 = vrot.slane %v92, %v96
    %v131 = vunpack.c.l.b16 %v44
    %v132 = vunpack.c.l.b16 %v45
    %v133 = vunpack.c.l.b16 %v46
    %v134 = vunpack.c.l.b16 %v47
    %v135 = vunpack.c.l.b16 %v48
    %v136 = vunpack.c.l.b16 %v49
    %v137 = vunpack.c.l.b16 %v50
    %v138 = vunpack.c.l.b16 %v51
    %v139 = vunpack.c.l.b16 %v52
    %v140 = vunpack.c.l.b16 %v53
    %v141 = vunpack.c.l.b16 %v54
    %v142 = vunpack.c.l.b16 %v55
    %v143 = vunpack.c.l.b16 %v56
    %v144 = vunpack.c.l.b16 %v57
    %v145 = vunpack.c.l.b16 %v58
    %v146 = vunpack.c.l.b16 %v59
    %v147 = vunpack.c.l.b16 %v60
    %v148 = vunpack.c.l.b16 %v61
    %v149 = vunpack.c.l.b16 %v62
    %v150 = vunpack.c.l.b16 %v63
    %v151 = vunpack.c.l.b16 %v64
    %v152 = vunpack.c.l.b16 %v65
    %v153 = vunpack.c.l.b16 %v66
    %v154 = vunpack.c.l.b16 %v67
    %v155 = vunpack.c.l.b16 %v68
    %v156 = vunpack.c.l.b16 %v69
    %v157 = vunpack.c.l.b16 %v70
    %v158 = vunpack.c.l.b16 %v71
    %v159 = vunpack.c.l.b16 %v72
    %v160 = vunpack.c.l.b16 %v73
    %v161 = vunpack.c.l.b16 %v74
    %v162 = vunpack.c.l.b16 %v75
    %v163 = vpack.c.b16 %v132, %v131
    %v164 = vpack.c.b16 %v134, %v133
    %v165 = vpack.c.b16 %v136, %v135
    %v166 = vpack.c.b16 %v138, %v137
    %v167 = vpack.c.b16 %v140, %v139
    %v168 = vpack.c.b16 %v142, %v141
    %v169 = vpack.c.b16 %v144, %v143
    %v170 = vpack.c.b16 %v146, %v145
    %v171 = vpack.c.b16 %v148, %v147
    %v172 = vpack.c.b16 %v150, %v149
    %v173 = vpack.c.b16 %v152, %v151
    %v174 = vpack.c.b16 %v154, %v153
    %v175 = vpack.c.b16 %v156, %v155
    %v176 = vpack.c.b16 %v158, %v157
    %v177 = vpack.c.b16 %v160, %v159
    %v178 = vpack.c.b16 %v162, %v161
    %v211 = vunpack.c.l.b16 %v76
    %v212 = vunpack.c.l.b16 %v77
    %v213 = vunpack.c.l.b16 %v78
    %v214 = vunpack.c.l.b16 %v79
    %v215 = vunpack.c.l.b16 %v80
    %v216 = vunpack.c.l.b16 %v81
    %v217 = vunpack.c.l.b16 %v82
    %v218 = vunpack.c.l.b16 %v83
    %v219 = vunpack.c.l.b16 %v84
    %v220 = vunpack.c.l.b16 %v85
    %v221 = vunpack.c.l.b16 %v86
    %v222 = vunpack.c.l.b16 %v87
    %v223 = vunpack.c.l.b16 %v88
    %v224 = vunpack.c.l.b16 %v89
    %v225 = vunpack.c.l.b16 %v90
    %v226 = vunpack.c.l.b16 %v91
    %v227 = vpack.c.b16 %v212, %v211
    %v228 = vpack.c.b16 %v214, %v213
    %v229 = vpack.c.b16 %v216, %v215
    %v230 = vpack.c.b16 %v218, %v217
    %v231 = vpack.c.b16 %v220, %v219
    %v232 = vpack.c.b16 %v222, %v221
    %v233 = vpack.c.b16 %v224, %v223
    %v234 = vpack.c.b16 %v226, %v225
    %243 = vmatprep.subr.bf16.mxu0 0
    %244 = vmatpush1.bf16.msra.mxu0 %v227
    %245 = vmatprep.subr.bf16.mxu0 0
    %246 = vmatpush1.bf16.msra.mxu0 %v228
    %247 = vmatprep.subr.bf16.mxu0 0
    %248 = vmatpush1.bf16.msra.mxu0 %v229
    %249 = vmatprep.subr.bf16.mxu0 0
    %250 = vmatpush1.bf16.msra.mxu0 %v230
    %251 = vmatprep.subr.bf16.mxu0 0
    %252 = vmatpush1.bf16.msra.mxu0 %v231
    %253 = vmatprep.subr.bf16.mxu0 0
    %254 = vmatpush1.bf16.msra.mxu0 %v232
    %255 = vmatprep.subr.bf16.mxu0 0
    %256 = vmatpush1.bf16.msra.mxu0 %v233
    %257 = vmatprep.subr.bf16.mxu0 0
    %258 = vmatpush1.bf16.msra.mxu0 %v234
    %259 = vmatprep.subr.bf16.mxu0 0
    %260 = vmatpush1.bf16.msra.mxu0 0
    %261 = vmatprep.subr.bf16.mxu0 0
    %262 = vmatpush1.bf16.msra.mxu0 0
    %263 = vmatprep.subr.bf16.mxu0 0
    %264 = vmatpush1.bf16.msra.mxu0 0
    %265 = vmatprep.subr.bf16.mxu0 0
    %266 = vmatpush1.bf16.msra.mxu0 0
    %267 = vmatprep.subr.bf16.mxu0 0
    %268 = vmatpush1.bf16.msra.mxu0 0
    %269 = vmatprep.subr.bf16.mxu0 0
    %270 = vmatpush1.bf16.msra.mxu0 0
    %271 = vmatprep.subr.bf16.mxu0 0
    %272 = vmatpush1.bf16.msra.mxu0 0
    %273 = vmatprep.subr.bf16.mxu0 0
    %274 = vmatpush1.bf16.msra.mxu0 0
    %275 = vmatprep.mubr.bf16.mxu0 0
    %276 = vmatmul.mubr.bf16.gmra.mrb[0].mxu0 %v163
    %v277 = vpop.f32.mrb[0].mxu0
    %v278 = vadd.f32 %v97, %v277
    %v279 = vpop.f32.mrb[0].mxu0
    %v280 = vpop.f32.mrb[0].mxu0
    %v281 = vadd.f32 %v97, %v280
    %v282 = vpop.f32.mrb[0].mxu0
    %283 = vmatprep.mubr.bf16.mxu0 0
    %284 = vmatmul.mubr.bf16.gmra.mrb[0].mxu0 %v164
    %v285 = vpop.f32.mrb[0].mxu0
    %v286 = vadd.f32 %v97, %v285
    %v287 = vpop.f32.mrb[0].mxu0
    %v288 = vpop.f32.mrb[0].mxu0
    %v289 = vadd.f32 %v97, %v288
    %v290 = vpop.f32.mrb[0].mxu0
    %291 = vmatprep.mubr.bf16.mxu0 0
    %292 = vmatmul.mubr.bf16.gmra.mrb[0].mxu0 %v165
    %v293 = vpop.f32.mrb[0].mxu0
    %v294 = vadd.f32 %v97, %v293
    %v295 = vpop.f32.mrb[0].mxu0
    %v296 = vpop.f32.mrb[0].mxu0
    %v297 = vadd.f32 %v97, %v296
    %v298 = vpop.f32.mrb[0].mxu0
    %299 = vmatprep.mubr.bf16.mxu0 0
    %300 = vmatmul.mubr.bf16.gmra.mrb[0].mxu0 %v166
    %v301 = vpop.f32.mrb[0].mxu0
    %v302 = vadd.f32 %v97, %v301
    %v303 = vpop.f32.mrb[0].mxu0
    %v304 = vpop.f32.mrb[0].mxu0
    %v305 = vadd.f32 %v97, %v304
    %v306 = vpop.f32.mrb[0].mxu0
    %307 = vmatprep.mubr.bf16.mxu0 0
    %308 = vmatmul.mubr.bf16.gmra.mrb[0].mxu0 %v167
    %v309 = vpop.f32.mrb[0].mxu0
    %v310 = vadd.f32 %v97, %v309
    %v311 = vpop.f32.mrb[0].mxu0
    %v312 = vpop.f32.mrb[0].mxu0
    %v313 = vadd.f32 %v97, %v312
    %v314 = vpop.f32.mrb[0].mxu0
    %315 = vmatprep.mubr.bf16.mxu0 0
    %316 = vmatmul.mubr.bf16.gmra.mrb[0].mxu0 %v168
    %v317 = vpop.f32.mrb[0].mxu0
    %v318 = vadd.f32 %v97, %v317
    %v319 = vpop.f32.mrb[0].mxu0
    %v320 = vpop.f32.mrb[0].mxu0
    %v321 = vadd.f32 %v97, %v320
    %v322 = vpop.f32.mrb[0].mxu0
    %323 = vmatprep.mubr.bf16.mxu0 0
    %324 = vmatmul.mubr.bf16.gmra.mrb[0].mxu0 %v169
    %v325 = vpop.f32.mrb[0].mxu0
    %v326 = vadd.f32 %v97, %v325
    %v327 = vpop.f32.mrb[0].mxu0
    %v328 = vpop.f32.mrb[0].mxu0
    %v329 = vadd.f32 %v97, %v328
    %v330 = vpop.f32.mrb[0].mxu0
    %331 = vmatprep.mubr.bf16.mxu0 0
    %332 = vmatmul.mubr.bf16.gmra.mrb[0].mxu0 %v170
    %v333 = vpop.f32.mrb[0].mxu0
    %v334 = vadd.f32 %v97, %v333
    %v335 = vpop.f32.mrb[0].mxu0
    %v336 = vpop.f32.mrb[0].mxu0
    %v337 = vadd.f32 %v97, %v336
    %v338 = vpop.f32.mrb[0].mxu0
    %339 = vmatprep.mubr.bf16.mxu0 0
    %340 = vmatmul.mubr.bf16.gmra.mrb[0].mxu0 %v171
    %v341 = vpop.f32.mrb[0].mxu0
    %v342 = vadd.f32 %v97, %v341
    %v343 = vpop.f32.mrb[0].mxu0
    %v344 = vpop.f32.mrb[0].mxu0
    %v345 = vadd.f32 %v97, %v344
    %v346 = vpop.f32.mrb[0].mxu0
    %347 = vmatprep.mubr.bf16.mxu0 0
    %348 = vmatmul.mubr.bf16.gmra.mrb[0].mxu0 %v172
    %v349 = vpop.f32.mrb[0].mxu0
    %v350 = vadd.f32 %v97, %v349
    %v351 = vpop.f32.mrb[0].mxu0
    %v352 = vpop.f32.mrb[0].mxu0
    %v353 = vadd.f32 %v97, %v352
    %v354 = vpop.f32.mrb[0].mxu0
    %355 = vmatprep.mubr.bf16.mxu0 0
    %356 = vmatmul.mubr.bf16.gmra.mrb[0].mxu0 %v173
    %v357 = vpop.f32.mrb[0].mxu0
    %v358 = vadd.f32 %v97, %v357
    %v359 = vpop.f32.mrb[0].mxu0
    %v360 = vpop.f32.mrb[0].mxu0
    %v361 = vadd.f32 %v97, %v360
    %v362 = vpop.f32.mrb[0].mxu0
    %363 = vmatprep.mubr.bf16.mxu0 0
    %364 = vmatmul.mubr.bf16.gmra.mrb[0].mxu0 %v174
    %v365 = vpop.f32.mrb[0].mxu0
    %v366 = vadd.f32 %v97, %v365
    %v367 = vpop.f32.mrb[0].mxu0
    %v368 = vpop.f32.mrb[0].mxu0
    %v369 = vadd.f32 %v97, %v368
    %v370 = vpop.f32.mrb[0].mxu0
    %371 = vmatprep.mubr.bf16.mxu0 0
    %372 = vmatmul.mubr.bf16.gmra.mrb[0].mxu0 %v175
    %v373 = vpop.f32.mrb[0].mxu0
    %v374 = vadd.f32 %v97, %v373
    %v375 = vpop.f32.mrb[0].mxu0
    %v376 = vpop.f32.mrb[0].mxu0
    %v377 = vadd.f32 %v97, %v376
    %v378 = vpop.f32.mrb[0].mxu0
    %379 = vmatprep.mubr.bf16.mxu0 0
    %380 = vmatmul.mubr.bf16.gmra.mrb[0].mxu0 %v176
    %v381 = vpop.f32.mrb[0].mxu0
    %v382 = vadd.f32 %v97, %v381
    %v383 = vpop.f32.mrb[0].mxu0
    %v384 = vpop.f32.mrb[0].mxu0
    %v385 = vadd.f32 %v97, %v384
    %v386 = vpop.f32.mrb[0].mxu0
    %387 = vmatprep.mubr.bf16.mxu0 0
    %388 = vmatmul.mubr.bf16.gmra.mrb[0].mxu0 %v177
    %v389 = vpop.f32.mrb[0].mxu0
    %v390 = vadd.f32 %v97, %v389
    %v391 = vpop.f32.mrb[0].mxu0
    %v392 = vpop.f32.mrb[0].mxu0
    %v393 = vadd.f32 %v97, %v392
    %v394 = vpop.f32.mrb[0].mxu0
    %395 = vmatprep.mubr.bf16.mxu0 0
    %396 = vmatmul.mubr.bf16.gmra.mrb[0].mxu0 %v178
    %v397 = vpop.f32.mrb[0].mxu0
    %v398 = vadd.f32 %v97, %v397
    %v399 = vpop.f32.mrb[0].mxu0
    %v400 = vpop.f32.mrb[0].mxu0
    %v401 = vadd.f32 %v97, %v400
    %v402 = vpop.f32.mrb[0].mxu0
    %403 = vdwg.mxu0
    %v404 = vpack.c.bf16 %v281, %v278
    %v405 = vpack.c.bf16 %v289, %v286
    %v406 = vpack.c.bf16 %v297, %v294
    %v407 = vpack.c.bf16 %v305, %v302
    %v408 = vpack.c.bf16 %v313, %v310
    %v409 = vpack.c.bf16 %v321, %v318
    %v410 = vpack.c.bf16 %v329, %v326
    %v411 = vpack.c.bf16 %v337, %v334
    %v412 = vpack.c.bf16 %v345, %v342
    %v413 = vpack.c.bf16 %v353, %v350
    %v414 = vpack.c.bf16 %v361, %v358
    %v415 = vpack.c.bf16 %v369, %v366
    %v416 = vpack.c.bf16 %v377, %v374
    %v417 = vpack.c.bf16 %v385, %v382
    %v418 = vpack.c.bf16 %v393, %v390
    %v419 = vpack.c.bf16 %v401, %v398
    %v436 = vunpack.c.l.b16 %v404
    %v437 = vunpack.c.h.b16 %v404
    %v438 = vunpack.c.l.b16 %v405
    %v439 = vunpack.c.h.b16 %v405
    %v440 = vunpack.c.l.b16 %v406
    %v441 = vunpack.c.h.b16 %v406
    %v442 = vunpack.c.l.b16 %v407
    %v443 = vunpack.c.h.b16 %v407
    %v444 = vunpack.c.l.b16 %v408
    %v445 = vunpack.c.h.b16 %v408
    %v446 = vunpack.c.l.b16 %v409
    %v447 = vunpack.c.h.b16 %v409
    %v448 = vunpack.c.l.b16 %v410
    %v449 = vunpack.c.h.b16 %v410
    %v450 = vunpack.c.l.b16 %v411
    %v451 = vunpack.c.h.b16 %v411
    %v452 = vunpack.c.l.b16 %v412
    %v453 = vunpack.c.h.b16 %v412
    %v454 = vunpack.c.l.b16 %v413
    %v455 = vunpack.c.h.b16 %v413
    %v456 = vunpack.c.l.b16 %v414
    %v457 = vunpack.c.h.b16 %v414
    %v458 = vunpack.c.l.b16 %v415
    %v459 = vunpack.c.h.b16 %v415
    %v460 = vunpack.c.l.b16 %v416
    %v461 = vunpack.c.h.b16 %v416
    %v462 = vunpack.c.l.b16 %v417
    %v463 = vunpack.c.h.b16 %v417
    %v464 = vunpack.c.l.b16 %v418
    %v465 = vunpack.c.h.b16 %v418
    %v466 = vunpack.c.l.b16 %v419
    %v467 = vunpack.c.h.b16 %v419
    %v468 = vpack.c.b16 %v436, %v436
    %v469 = vpack.c.b16 %v437, %v437
    %v470 = vpack.c.b16 %v438, %v438
    %v471 = vpack.c.b16 %v439, %v439
    %v472 = vpack.c.b16 %v440, %v440
    %v473 = vpack.c.b16 %v441, %v441
    %v474 = vpack.c.b16 %v442, %v442
    %v475 = vpack.c.b16 %v443, %v443
    %v476 = vpack.c.b16 %v444, %v444
    %v477 = vpack.c.b16 %v445, %v445
    %v478 = vpack.c.b16 %v446, %v446
    %v479 = vpack.c.b16 %v447, %v447
    %v480 = vpack.c.b16 %v448, %v448
    %v481 = vpack.c.b16 %v449, %v449
    %v482 = vpack.c.b16 %v450, %v450
    %v483 = vpack.c.b16 %v451, %v451
    %v484 = vpack.c.b16 %v452, %v452
    %v485 = vpack.c.b16 %v453, %v453
    %v486 = vpack.c.b16 %v454, %v454
    %v487 = vpack.c.b16 %v455, %v455
    %v488 = vpack.c.b16 %v456, %v456
    %v489 = vpack.c.b16 %v457, %v457
    %v490 = vpack.c.b16 %v458, %v458
    %v491 = vpack.c.b16 %v459, %v459
    %v492 = vpack.c.b16 %v460, %v460
    %v493 = vpack.c.b16 %v461, %v461
    %v494 = vpack.c.b16 %v462, %v462
    %v495 = vpack.c.b16 %v463, %v463
    %v496 = vpack.c.b16 %v464, %v464
    %v497 = vpack.c.b16 %v465, %v465
    %v498 = vpack.c.b16 %v466, %v466
    %v499 = vpack.c.b16 %v467, %v467
    %532 = vst [vmem:[#allocation7] sm:$0xf] %v468
    %533 = vst [vmem:[#allocation7 + $0x4] sm:$0xf] %v469
    %534 = vst [vmem:[#allocation7 + $0x8] sm:$0xf] %v470
    %535 = vst [vmem:[#allocation7 + $0xc] sm:$0xf] %v471
    %536 = vst [vmem:[#allocation7 + $0x10] sm:$0xf] %v472
    %537 = vst [vmem:[#allocation7 + $0x14] sm:$0xf] %v473
    %538 = vst [vmem:[#allocation7 + $0x18] sm:$0xf] %v474
    %539 = vst [vmem:[#allocation7 + $0x1c] sm:$0xf] %v475
    %540 = vst [vmem:[#allocation7 + $0x20] sm:$0xf] %v476
    %541 = vst [vmem:[#allocation7 + $0x24] sm:$0xf] %v477
    %542 = vst [vmem:[#allocation7 + $0x28] sm:$0xf] %v478
    %543 = vst [vmem:[#allocation7 + $0x2c] sm:$0xf] %v479
    %544 = vst [vmem:[#allocation7 + $0x30] sm:$0xf] %v480
    %545 = vst [vmem:[#allocation7 + $0x34] sm:$0xf] %v481
    %546 = vst [vmem:[#allocation7 + $0x38] sm:$0xf] %v482
    %547 = vst [vmem:[#allocation7 + $0x3c] sm:$0xf] %v483
    %548 = vst [vmem:[#allocation7 + $0x40] sm:$0xf] %v484
    %549 = vst [vmem:[#allocation7 + $0x44] sm:$0xf] %v485
    %550 = vst [vmem:[#allocation7 + $0x48] sm:$0xf] %v486
    %551 = vst [vmem:[#allocation7 + $0x4c] sm:$0xf] %v487
    %552 = vst [vmem:[#allocation7 + $0x50] sm:$0xf] %v488
    %553 = vst [vmem:[#allocation7 + $0x54] sm:$0xf] %v489
    %554 = vst [vmem:[#allocation7 + $0x58] sm:$0xf] %v490
    %555 = vst [vmem:[#allocation7 + $0x5c] sm:$0xf] %v491
    %556 = vst [vmem:[#allocation7 + $0x60] sm:$0xf] %v492
    %557 = vst [vmem:[#allocation7 + $0x64] sm:$0xf] %v493
    %558 = vst [vmem:[#allocation7 + $0x68] sm:$0xf] %v494
    %559 = vst [vmem:[#allocation7 + $0x6c] sm:$0xf] %v495
    %560 = vst [vmem:[#allocation7 + $0x70] sm:$0xf] %v496
    %561 = vst [vmem:[#allocation7 + $0x74] sm:$0xf] %v497
    %562 = vst [vmem:[#allocation7 + $0x78] sm:$0xf] %v498
    %563 = vst [vmem:[#allocation7 + $0x7c] sm:$0xf] %v499
    // Predicated region
    $region22: #{tpu_custom_call.1} parent=1 // pred_check
      _
    $region23: #{tpu_custom_call.1} parent=1 // pred_check_branch
      %565 = sbr.rel (0) target = $region25
    $region24: #{tpu_custom_call.1} parent=1 // pred_region
      %s567 = ssub.s32 2048, 2048
      %568 = vsyncadd [#allocation4], %s567
      %s569 = sshll.u32 [#allocation7], 4
      %s570 = int_to_ptr.vmem [resolvable:$true] %s569
      %575 = dma.vmem_to_hbm [thread:$0]  %s570, 2048, %s3, [#allocation4], 64, 64, 4
    $region25: #{tpu_custom_call.1} parent=1 // pred_fallthru
      _
    // Predicated region
    $region26: #{tpu_custom_call.1} parent=1 // pred_check
      _
    $region27: #{tpu_custom_call.1} parent=1 // pred_check_branch
      %577 = sbr.rel (0) target = $region29
    $region28: #{tpu_custom_call.1} parent=1 // pred_region
      %578 = dma.done [#allocation4], 2048
    $region29: #{tpu_custom_call.1} parent=1 // pred_fallthru
      _
    %579 = vsyncpa [#allocation3], 1
    %580 = vsyncpa [#allocation6], 1
    %581 = vsyncpa [#allocation4], 1

</llo_original>
